<compile_context>
chip_gen: v7x
topology: tpu7x:2x2x1
jax: 0.10.0
libtpu: 0.0.40
codegen_flags: <defaults>
</compile_context>

<pallas_src>
import math

import jax
import jax.numpy as jnp
from jax.experimental import pallas as pl
from jax.experimental.pallas import tpu as pltpu

_PI = math.pi
# torch.linspace(-5/8*pi, 3/8*pi, 5) and torch.linspace(-3/8*pi, 5/8*pi, 5):
# five disjoint, adjacent half-open angle bins (baked-in, non-trainable).
_LOWER = tuple((-5.0 / 8.0) * _PI + i * (_PI / 4.0) for i in range(5))
_UPPER = tuple((-3.0 / 8.0) * _PI + i * (_PI / 4.0) for i in range(5))
_X_SHIFTS = (0, 1, 1, 1, 0)
_Y_SHIFTS = (1, 1, 0, -1, 1)

_MAX_BLOCK_ELEMS = 128 * 1024  # 512 KiB of f32 per block (inputs+output x2 buffers ~3 MiB)


def _round_up(x: int, m: int) -> int:
    return (x + m - 1) // m * m


def _canny_nms_kernel(mag_ref, ang_ref, bnd_ref, out_ref):
    """Non-maximum suppression along the quantized gradient direction.

    mag_ref : (TH, WP)     magnitude tile
    ang_ref : (TH, WP)     angle tile
    bnd_ref : (1, 2, WP)   [row above tile, row below tile] (zeros at image border)
    out_ref : (TH, WP)     suppressed magnitude tile
    """
    m = mag_ref[...]
    ang = ang_ref[...]
    bnd = bnd_ref[...]
    above = bnd[0, 0:1, :]  # (1, WP)
    below = bnd[0, 1:2, :]  # (1, WP)

    TH, WP = m.shape
    row_ids = jax.lax.broadcasted_iota(jnp.int32, (TH, WP), 0)
    col_ids = jax.lax.broadcasted_iota(jnp.int32, (TH, WP), 1)
    first_row = row_ids == 0
    last_row = row_ids == TH - 1
    first_col = col_ids == 0
    last_col = col_ids == WP - 1
    zero = jnp.float32(0.0)

    # Row neighbours via sublane roll (positive shifts only); halo rows come from bnd.
    up = jnp.where(first_row, above, pltpu.roll(m, shift=1, axis=0))        # mag[r-1, c]
    down = jnp.where(last_row, below, pltpu.roll(m, shift=TH - 1, axis=0))  # mag[r+1, c]

    def shift_left(x):   # value at [r, c] <- x[r, c+1], zero past the right edge
        return jnp.where(last_col, zero, pltpu.roll(x, shift=WP - 1, axis=1))

    def shift_right(x):  # value at [r, c] <- x[r, c-1], zero past the left edge
        return jnp.where(first_col, zero, pltpu.roll(x, shift=1, axis=1))

    right = shift_left(m)    # mag[r,   c+1]
    left = shift_right(m)    # mag[r,   c-1]
    dr = shift_left(down)    # mag[r+1, c+1]
    ul = shift_right(up)     # mag[r-1, c-1]
    ur = shift_left(up)      # mag[r-1, c+1]
    dl = shift_right(down)   # mag[r+1, c-1]

    # Angle bins.  i=0 and i=4 share shift (0, 1); bins are pairwise disjoint, so the
    # original multiply chain prod_i(1 - mask_i) == 1 - OR_i(mask_i).
    seg_v = ((ang >= _LOWER[0]) & (ang < _UPPER[0])) | (
        (ang >= _LOWER[4]) & (ang < _UPPER[4]))
    seg_d1 = (ang >= _LOWER[1]) & (ang < _UPPER[1])
    seg_h = (ang >= _LOWER[2]) & (ang < _UPPER[2])
    seg_d2 = (ang >= _LOWER[3]) & (ang < _UPPER[3])

    suppress = seg_v & ((m < down) | (m < up))
    suppress = suppress | (seg_d1 & ((m < dr) | (m < ul)))
    suppress = suppress | (seg_h & ((m < right) | (m < left)))
    suppress = suppress | (seg_d2 & ((m < ur) | (m < dl)))

    out_ref[...] = jnp.where(suppress, zero, m)


def canny_edge_detector(magnitude: jax.Array, angle: jax.Array,
                        tile_h: int | None = None) -> jax.Array:
    """JAX/Pallas equivalent of CannyEdgeDetector.forward((magnitude, angle))."""
    assert magnitude.ndim == 2 and magnitude.shape == angle.shape
    H, W = magnitude.shape
    assert H > 0 and W > 0
    magnitude = magnitude.astype(jnp.float32)
    angle = angle.astype(jnp.float32)

    # Lane-dense width; row-tile sized to keep blocks <= ~512 KiB and a multiple of 8.
    WP = _round_up(W, 128)
    H8 = _round_up(H, 8)
    if tile_h is None:
        max_th = max(8, (_MAX_BLOCK_ELEMS // WP) // 8 * 8)
        TILE_H = min(512, max_th, H8)
    else:
        assert tile_h >= 8 and tile_h % 8 == 0
        TILE_H = min(tile_h, H8)
    HP = _round_up(H, TILE_H)
    num_tiles = HP // TILE_H

    # Zero padding matches F.pad's zero border semantics; padded region is sliced off.
    mag_p = jnp.pad(magnitude, ((0, HP - H), (0, WP - W)))
    ang_p = jnp.pad(angle, ((0, HP - H), (0, WP - W)))

    # One-row halo per tile: row above and row below (zeros at the image border).
    zrow = jnp.zeros((1, WP), jnp.float32)
    if num_tiles > 1:
        above = jnp.concatenate([zrow, mag_p[TILE_H - 1:HP - 1:TILE_H]], axis=0)
        below = jnp.concatenate([mag_p[TILE_H:HP:TILE_H], zrow], axis=0)
    else:
        above = zrow
        below = zrow
    boundary = jnp.stack([above, below], axis=1)  # (num_tiles, 2, WP)

    out = pl.pallas_call(
        _canny_nms_kernel,
        out_shape=jax.ShapeDtypeStruct((HP, WP), jnp.float32),
        grid=(num_tiles,),
        in_specs=[
            pl.BlockSpec((TILE_H, WP), lambda i: (i, 0)),
            pl.BlockSpec((TILE_H, WP), lambda i: (i, 0)),
            pl.BlockSpec((1, 2, WP), lambda i: (i, 0, 0)),
        ],
        out_specs=pl.BlockSpec((TILE_H, WP), lambda i: (i, 0)),
        compiler_params=pltpu.CompilerParams(
            dimension_semantics=("parallel",)),
    )(mag_p, ang_p, boundary)
    return out[:H, :W]


def _reference(magnitude: jax.Array, angle: jax.Array) -> jax.Array:
    """Pure-JAX transcription of the PyTorch forward, for verification."""
    H, W = magnitude.shape
    pad = jnp.pad(magnitude, ((2, 2), (2, 2)))
    out = magnitude
    for i in range(5):
        xs, ys = _X_SHIFTS[i], _Y_SHIFTS[i]
        pos = jax.lax.dynamic_slice(pad, (2 + ys, 2 + xs), (H, W))
        neg = jax.lax.dynamic_slice(pad, (2 - ys, 2 - xs), (H, W))
        seg = (angle >= _LOWER[i]) & (angle < _UPPER[i])
        not_max = (magnitude < pos) | (magnitude < neg)
        out = (1.0 - (seg & not_max).astype(jnp.float32)) * out
    return out


if __name__ == "__main__":
    key = jax.random.PRNGKey(0)
    k_mag, k_ang, k_mag2, k_ang2 = jax.random.split(key, 4)

    # Case 1: small square image (spatial=16), single tile, lane padding 16 -> 128.
    H, W = 16, 16
    magnitude = jax.random.uniform(k_mag, (H, W), dtype=jnp.float32)
    angle = jax.random.uniform(k_ang, (H, W), dtype=jnp.float32,
                               minval=-math.pi, maxval=math.pi)
    out = canny_edge_detector(magnitude, angle)
    out = jax.block_until_ready(out)
    ref = _reference(magnitude, angle)
    assert out.shape == (H, W) and out.dtype == jnp.float32
    assert jnp.allclose(out, ref, atol=1e-6), "Pallas kernel mismatch (16x16)"

    # Case 2: non-aligned width + forced small row tile to exercise the multi-tile
    # halo path (4 row tiles of 8 rows each).
    H2, W2 = 32, 40
    magnitude2 = jax.random.uniform(k_mag2, (H2, W2), dtype=jnp.float32)
    angle2 = jax.random.uniform(k_ang2, (H2, W2), dtype=jnp.float32,
                                minval=-math.pi, maxval=math.pi)
    out2 = canny_edge_detector(magnitude2, angle2, tile_h=8)
    out2 = jax.block_until_ready(out2)
    ref2 = _reference(magnitude2, angle2)
    assert out2.shape == (H2, W2) and out2.dtype == jnp.float32
    assert jnp.allclose(out2, ref2, atol=1e-6), "Pallas kernel mismatch (32x40, tiled)"

    print("KERNEL_OK")
</pallas_src>

<mosaic_0001>
module attributes {stable_mosaic.version = 11 : i64} {
  func.func @_canny_nms_kernel(%arg0: i32, %arg1: memref<16x128xf32, #tpu.memory_space<vmem>>, %arg2: memref<16x128xf32, #tpu.memory_space<vmem>>, %arg3: memref<1x2x128xf32, #tpu.memory_space<vmem>>, %arg4: memref<16x128xf32, #tpu.memory_space<vmem>>) attributes {dimension_semantics = [#tpu.dimension_semantics<parallel>], iteration_bounds = array<i64: 1>, scalar_prefetch = 0 : i64, scratch_operands = 0 : i64, tpu.core_type = #tpu.core_type<tc>, window_params = [{transform_indices = @transform_0, window_bounds = array<i64: 16, 128>}, {transform_indices = @transform_1, window_bounds = array<i64: 16, 128>}, {transform_indices = @transform_2, window_bounds = array<i64: 1, 2, 128>}, {transform_indices = @transform_3, window_bounds = array<i64: 16, 128>}]} {
    %c0 = arith.constant 0 : index
    %c0_0 = arith.constant 0 : index
    %0 = vector.load %arg1[%c0, %c0_0] : memref<16x128xf32, #tpu.memory_space<vmem>>, vector<16x128xf32>
    %c0_1 = arith.constant 0 : index
    %c0_2 = arith.constant 0 : index
    %1 = vector.load %arg2[%c0_1, %c0_2] : memref<16x128xf32, #tpu.memory_space<vmem>>, vector<16x128xf32>
    %c0_3 = arith.constant 0 : index
    %c0_4 = arith.constant 0 : index
    %c0_5 = arith.constant 0 : index
    %2 = vector.load %arg3[%c0_3, %c0_4, %c0_5] : memref<1x2x128xf32, #tpu.memory_space<vmem>>, vector<1x2x128xf32>
    %3 = vector.extract_strided_slice %2 {offsets = [0, 0, 0], sizes = [1, 1, 128], strides = [1, 1, 1]} : vector<1x2x128xf32> to vector<1x1x128xf32>
    %4 = vector.shape_cast %3 : vector<1x1x128xf32> to vector<1x128xf32>
    %5 = vector.extract_strided_slice %2 {offsets = [0, 1, 0], sizes = [1, 1, 128], strides = [1, 1, 1]} : vector<1x2x128xf32> to vector<1x1x128xf32>
    %6 = vector.shape_cast %5 : vector<1x1x128xf32> to vector<1x128xf32>
    %7 = tpu.iota {dimensions = array<i32: 0>} : vector<16x128xi32>
    %8 = tpu.iota {dimensions = array<i32: 1>} : vector<16x128xi32>
    %c0_i32 = arith.constant 0 : i32
    %9 = vector.broadcast %c0_i32 : i32 to vector<16x128xi32>
    %10 = arith.cmpi eq, %7, %9 : vector<16x128xi32>
    %c15_i32 = arith.constant 15 : i32
    %11 = vector.broadcast %c15_i32 : i32 to vector<16x128xi32>
    %12 = arith.cmpi eq, %7, %11 : vector<16x128xi32>
    %c0_i32_6 = arith.constant 0 : i32
    %13 = vector.broadcast %c0_i32_6 : i32 to vector<16x128xi32>
    %14 = arith.cmpi eq, %8, %13 : vector<16x128xi32>
    %c127_i32 = arith.constant 127 : i32
    %15 = vector.broadcast %c127_i32 : i32 to vector<16x128xi32>
    %16 = arith.cmpi eq, %8, %15 : vector<16x128xi32>
    %c1_i32 = arith.constant 1 : i32
    %17 = tpu.dynamic_rotate %0 by %c1_i32 dim 0 : vector<16x128xf32>, i32 -> vector<16x128xf32>
    %18 = vector.shape_cast %4 : vector<1x128xf32> to vector<1x128xf32>
    %19 = vector.broadcast %18 : vector<1x128xf32> to vector<16x128xf32>
    %20 = arith.select %10, %19, %17 : vector<16x128xi1>, vector<16x128xf32>
    %c15_i32_7 = arith.constant 15 : i32
    %21 = tpu.dynamic_rotate %0 by %c15_i32_7 dim 0 : vector<16x128xf32>, i32 -> vector<16x128xf32>
    %22 = vector.shape_cast %6 : vector<1x128xf32> to vector<1x128xf32>
    %23 = vector.broadcast %22 : vector<1x128xf32> to vector<16x128xf32>
    %24 = arith.select %12, %23, %21 : vector<16x128xi1>, vector<16x128xf32>
    %c127_i32_8 = arith.constant 127 : i32
    %25 = tpu.dynamic_rotate %0 by %c127_i32_8 dim 1 : vector<16x128xf32>, i32 -> vector<16x128xf32>
    %cst = arith.constant 0.000000e+00 : f32
    %26 = vector.broadcast %cst : f32 to vector<16x128xf32>
    %27 = arith.select %16, %26, %25 : vector<16x128xi1>, vector<16x128xf32>
    %c1_i32_9 = arith.constant 1 : i32
    %28 = tpu.dynamic_rotate %0 by %c1_i32_9 dim 1 : vector<16x128xf32>, i32 -> vector<16x128xf32>
    %cst_10 = arith.constant 0.000000e+00 : f32
    %29 = vector.broadcast %cst_10 : f32 to vector<16x128xf32>
    %30 = arith.select %14, %29, %28 : vector<16x128xi1>, vector<16x128xf32>
    %c127_i32_11 = arith.constant 127 : i32
    %31 = tpu.dynamic_rotate %24 by %c127_i32_11 dim 1 : vector<16x128xf32>, i32 -> vector<16x128xf32>
    %cst_12 = arith.constant 0.000000e+00 : f32
    %32 = vector.broadcast %cst_12 : f32 to vector<16x128xf32>
    %33 = arith.select %16, %32, %31 : vector<16x128xi1>, vector<16x128xf32>
    %c1_i32_13 = arith.constant 1 : i32
    %34 = tpu.dynamic_rotate %20 by %c1_i32_13 dim 1 : vector<16x128xf32>, i32 -> vector<16x128xf32>
    %cst_14 = arith.constant 0.000000e+00 : f32
    %35 = vector.broadcast %cst_14 : f32 to vector<16x128xf32>
    %36 = arith.select %14, %35, %34 : vector<16x128xi1>, vector<16x128xf32>
    %c127_i32_15 = arith.constant 127 : i32
    %37 = tpu.dynamic_rotate %20 by %c127_i32_15 dim 1 : vector<16x128xf32>, i32 -> vector<16x128xf32>
    %cst_16 = arith.constant 0.000000e+00 : f32
    %38 = vector.broadcast %cst_16 : f32 to vector<16x128xf32>
    %39 = arith.select %16, %38, %37 : vector<16x128xi1>, vector<16x128xf32>
    %c1_i32_17 = arith.constant 1 : i32
    %40 = tpu.dynamic_rotate %24 by %c1_i32_17 dim 1 : vector<16x128xf32>, i32 -> vector<16x128xf32>
    %cst_18 = arith.constant 0.000000e+00 : f32
    %41 = vector.broadcast %cst_18 : f32 to vector<16x128xf32>
    %42 = arith.select %14, %41, %40 : vector<16x128xi1>, vector<16x128xf32>
    %cst_19 = arith.constant -1.96349537 : f32
    %43 = vector.broadcast %cst_19 : f32 to vector<16x128xf32>
    %44 = arith.cmpf oge, %1, %43 : vector<16x128xf32>
    %cst_20 = arith.constant -1.17809725 : f32
    %45 = vector.broadcast %cst_20 : f32 to vector<16x128xf32>
    %46 = arith.cmpf olt, %1, %45 : vector<16x128xf32>
    %47 = arith.andi %44, %46 : vector<16x128xi1>
    %cst_21 = arith.constant 1.17809725 : f32
    %48 = vector.broadcast %cst_21 : f32 to vector<16x128xf32>
    %49 = arith.cmpf oge, %1, %48 : vector<16x128xf32>
    %cst_22 = arith.constant 1.96349537 : f32
    %50 = vector.broadcast %cst_22 : f32 to vector<16x128xf32>
    %51 = arith.cmpf olt, %1, %50 : vector<16x128xf32>
    %52 = arith.andi %49, %51 : vector<16x128xi1>
    %53 = arith.ori %47, %52 : vector<16x128xi1>
    %cst_23 = arith.constant -1.17809725 : f32
    %54 = vector.broadcast %cst_23 : f32 to vector<16x128xf32>
    %55 = arith.cmpf oge, %1, %54 : vector<16x128xf32>
    %cst_24 = arith.constant -0.392699093 : f32
    %56 = vector.broadcast %cst_24 : f32 to vector<16x128xf32>
    %57 = arith.cmpf olt, %1, %56 : vector<16x128xf32>
    %58 = arith.andi %55, %57 : vector<16x128xi1>
    %cst_25 = arith.constant -0.392699093 : f32
    %59 = vector.broadcast %cst_25 : f32 to vector<16x128xf32>
    %60 = arith.cmpf oge, %1, %59 : vector<16x128xf32>
    %cst_26 = arith.constant 0.392699093 : f32
    %61 = vector.broadcast %cst_26 : f32 to vector<16x128xf32>
    %62 = arith.cmpf olt, %1, %61 : vector<16x128xf32>
    %63 = arith.andi %60, %62 : vector<16x128xi1>
    %cst_27 = arith.constant 0.392699093 : f32
    %64 = vector.broadcast %cst_27 : f32 to vector<16x128xf32>
    %65 = arith.cmpf oge, %1, %64 : vector<16x128xf32>
    %cst_28 = arith.constant 1.17809725 : f32
    %66 = vector.broadcast %cst_28 : f32 to vector<16x128xf32>
    %67 = arith.cmpf olt, %1, %66 : vector<16x128xf32>
    %68 = arith.andi %65, %67 : vector<16x128xi1>
    %69 = arith.cmpf olt, %0, %24 : vector<16x128xf32>
    %70 = arith.cmpf olt, %0, %20 : vector<16x128xf32>
    %71 = arith.ori %69, %70 : vector<16x128xi1>
    %72 = arith.andi %53, %71 : vector<16x128xi1>
    %73 = arith.cmpf olt, %0, %33 : vector<16x128xf32>
    %74 = arith.cmpf olt, %0, %36 : vector<16x128xf32>
    %75 = arith.ori %73, %74 : vector<16x128xi1>
    %76 = arith.andi %58, %75 : vector<16x128xi1>
    %77 = arith.ori %72, %76 : vector<16x128xi1>
    %78 = arith.cmpf olt, %0, %27 : vector<16x128xf32>
    %79 = arith.cmpf olt, %0, %30 : vector<16x128xf32>
    %80 = arith.ori %78, %79 : vector<16x128xi1>
    %81 = arith.andi %63, %80 : vector<16x128xi1>
    %82 = arith.ori %77, %81 : vector<16x128xi1>
    %83 = arith.cmpf olt, %0, %39 : vector<16x128xf32>
    %84 = arith.cmpf olt, %0, %42 : vector<16x128xf32>
    %85 = arith.ori %83, %84 : vector<16x128xi1>
    %86 = arith.andi %68, %85 : vector<16x128xi1>
    %87 = arith.ori %82, %86 : vector<16x128xi1>
    %cst_29 = arith.constant 0.000000e+00 : f32
    %88 = vector.broadcast %cst_29 : f32 to vector<16x128xf32>
    %89 = arith.select %87, %88, %0 : vector<16x128xi1>, vector<16x128xf32>
    %c0_30 = arith.constant 0 : index
    %c0_31 = arith.constant 0 : index
    %90 = vector.load %arg4[%c0_30, %c0_31] : memref<16x128xf32, #tpu.memory_space<vmem>>, vector<16x128xf32>
    tpu.vector_store %arg4[%c0_30, %c0_31], %89 {strides = array<i32>} : memref<16x128xf32, #tpu.memory_space<vmem>>, vector<16x128xf32>,
    return
  }
  func.func @transform_0(%arg0: i32) -> (i32, i32) {
    %c0_i32 = arith.constant 0 : i32
    %c0_i32_0 = arith.constant 0 : i32
    return %arg0, %c0_i32 : i32, i32
  }
  func.func @transform_1(%arg0: i32) -> (i32, i32) {
    %c0_i32 = arith.constant 0 : i32
    %c0_i32_0 = arith.constant 0 : i32
    return %arg0, %c0_i32 : i32, i32
  }
  func.func @transform_2(%arg0: i32) -> (i32, i32, i32) {
    %c0_i32 = arith.constant 0 : i32
    %c0_i32_0 = arith.constant 0 : i32
    %c0_i32_1 = arith.constant 0 : i32
    return %arg0, %c0_i32, %c0_i32_0 : i32, i32, i32
  }
  func.func @transform_3(%arg0: i32) -> (i32, i32) {
    %c0_i32 = arith.constant 0 : i32
    %c0_i32_0 = arith.constant 0 : i32
    return %arg0, %c0_i32 : i32, i32
  }
}

</mosaic_0001>

<llo_original>
// kernel: tpu_custom_call.1
$region0: #{tpu_custom_call.1}
  #allocation0 [shape = 'u32[]', space=smem, size = 0x4, offset = 0x4, fixed_abs, tag = 'smem constant byte address 0x4 - core index']
  #allocation1 [shape = 'u32[144,128]{1,0:T(1,128)}', space=vmem, size = 0x12000, scoped, tag = 'internal scratch']
  %s0 = inlined_call_operand.hbm [shape: f32[16,128], index: 0, kind: input, shape index: {}]
  %s1 = inlined_call_operand.hbm [shape: f32[16,128], index: 1, kind: input, shape index: {}]
  %s2 = inlined_call_operand.vmem [shape: f32[1,2,128], index: 2, kind: input, shape index: {}]
  %s3 = inlined_call_operand.hbm [shape: f32[16,128], index: 3, kind: output, shape index: {}]
  %s4 = sld [smem:[#allocation0]]
  $region30: #{tpu_custom_call.1} parent=0
    _
  %s6 = ssub.s32 1, %s4
  %s7 = scalar_select 0, %s6, %s4
  $region1: #{tpu_custom_call.1} parent=0
    #allocation2 [shape = 'u8[8192]{0}', space=vmem, size = 0x2000, scoped, tag = 'input window, operand 0, single buffered']
    #allocation3 [shape = 's32[1]{0}', space=sflag, size = 0x4, scoped, tag = 'scoped memory for tpu_custom_call.1']
    #allocation4 [shape = 's32[1]{0}', space=sflag, size = 0x4, scoped, tag = 'scoped memory for tpu_custom_call.1']
    #allocation5 [shape = 'u8[8192]{0}', space=vmem, size = 0x2000, scoped, tag = 'input window, operand 1, single buffered']
    #allocation6 [shape = 's32[1]{0}', space=sflag, size = 0x4, scoped, tag = 'scoped memory for tpu_custom_call.1']
    #allocation7 [shape = 'u8[8192]{0}', space=vmem, size = 0x2000, scoped, tag = 'output window, operand 0, single buffered']
    %8 = vsyncpa [#allocation3], 0
    %9 = vsyncpa [#allocation6], 0
    %10 = vsyncpa [#allocation4], 0
    // Predicated region
    $region2: #{tpu_custom_call.1} parent=1 // pred_check
      _
    $region3: #{tpu_custom_call.1} parent=1 // pred_check_branch
      %12 = sbr.rel (0) target = $region5
    $region4: #{tpu_custom_call.1} parent=1 // pred_region
      %s14 = ssub.s32 256, 256
      %15 = vsyncadd [#allocation3], %s14
      %s16 = sshll.u32 [#allocation2], 4
      %s17 = int_to_ptr.vmem [resolvable:$true] %s16
      %22 = dma.hbm_to_vmem [thread:$0]  %s0, 256, %s17, [#allocation3], 128, 128, 8
    $region5: #{tpu_custom_call.1} parent=1 // pred_fallthru
      _
    // Predicated region
    $region6: #{tpu_custom_call.1} parent=1 // pred_check
      _
    $region7: #{tpu_custom_call.1} parent=1 // pred_check_branch
      %24 = sbr.rel (0) target = $region9
    $region8: #{tpu_custom_call.1} parent=1 // pred_region
      %s26 = ssub.s32 256, 256
      %27 = vsyncadd [#allocation6], %s26
      %s28 = sshll.u32 [#allocation5], 4
      %s29 = int_to_ptr.vmem [resolvable:$true] %s28
      %34 = dma.hbm_to_vmem [thread:$0]  %s1, 256, %s29, [#allocation6], 128, 128, 8
    $region9: #{tpu_custom_call.1} parent=1 // pred_fallthru
      _
    // Predicated region
    $region10: #{tpu_custom_call.1} parent=1 // pred_check
      _
    $region11: #{tpu_custom_call.1} parent=1 // pred_check_branch
      %36 = sbr.rel (0) target = $region13
    $region12: #{tpu_custom_call.1} parent=1 // pred_region
      _
    $region13: #{tpu_custom_call.1} parent=1 // pred_fallthru
      _
    // Predicated region
    $region14: #{tpu_custom_call.1} parent=1 // pred_check
      _
    $region15: #{tpu_custom_call.1} parent=1 // pred_check_branch
      %38 = sbr.rel (0) target = $region17
    $region16: #{tpu_custom_call.1} parent=1 // pred_region
      %39 = dma.done [#allocation3], 256
    $region17: #{tpu_custom_call.1} parent=1 // pred_fallthru
      _
    // Predicated region
    $region18: #{tpu_custom_call.1} parent=1 // pred_check
      _
    $region19: #{tpu_custom_call.1} parent=1 // pred_check_branch
      %41 = sbr.rel (0) target = $region21
    $region20: #{tpu_custom_call.1} parent=1 // pred_region
      %42 = dma.done [#allocation6], 256
    $region21: #{tpu_custom_call.1} parent=1 // pred_fallthru
      _
    %v43 = vld [vmem:[#allocation2] sm:$0xff]
    %v44 = vld [vmem:[#allocation2 + $0x8] sm:$0xff]
    %v45 = vld [vmem:[#allocation5] sm:$0xff]
    %v46 = vld [vmem:[#allocation5 + $0x8] sm:$0xff]
    %v47 = vld [vmem:[%s2] sm:$0x3]
    %v48 = vlaneseq
    %v49 = vshrl.u32 %v48, 7
    %v50 = vadd.s32 %v49, 8
    %v51 = vlaneseq
    %v52 = vand.u32 %v51, 127
    %vm53 = vcmp.eq.s32.totalorder %v49, 0
    %vm54 = vcmp.eq.s32.totalorder %v50, 0
    %vm55 = vcmp.eq.s32.totalorder %v49, 15
    %vm56 = vcmp.eq.s32.totalorder %v50, 15
    %vm57 = vcmp.eq.s32.totalorder %v52, 0
    %vm58 = vcmp.eq.s32.totalorder %v52, 127
    %v59 = vrot.slane %v43, 7
    %v60 = vrot.slane %v44, 7
    %vm61 = vcmp.lt.s32.totalorder %v49, 1
    %v62 = vsel %vm61, %v59, %v60
    %v63 = vsel %vm61, %v60, %v59
    %v64 = vlaneseq
    %v65 = vshrl.u32 %v64, 7
    %v66 = vsub.s32 0, %v65
    %v67 = vrot.slane %v47, %v66
    %v68 = vsel %vm53, %v67, %v63
    %v69 = vsel %vm54, %v67, %v62
    %v70 = vrot.slane %v43, 1
    %v71 = vrot.slane %v44, 1
    %vm72 = vcmp.lt.s32.totalorder %v49, 7
    %v73 = vsel %vm72, %v70, %v71
    %v74 = vsel %vm72, %v71, %v70
    %v75 = vlaneseq
    %v76 = vshrl.u32 %v75, 7
    %v77 = vsub.s32 1, %v76
    %v78 = vrot.slane %v47, %v77
    %v79 = vsel %vm55, %v78, %v73
    %v80 = vsel %vm56, %v78, %v74
    %81 = vrot.lane.b32.xlu0 %v43, 127
    %v82 = vpop.permute.xlu0 %81
    %83 = vrot.lane.b32.xlu0 %v44, 127
    %v84 = vpop.permute.xlu0 %83
    %v85 = vsel %vm58, 0.0, %v82
    %v86 = vsel %vm58, 0.0, %v84
    %87 = vrot.lane.b32.xlu0 %v43, 1
    %v88 = vpop.permute.xlu0 %87
    %89 = vrot.lane.b32.xlu0 %v44, 1
    %v90 = vpop.permute.xlu0 %89
    %v91 = vsel %vm57, 0.0, %v88
    %v92 = vsel %vm57, 0.0, %v90
    %93 = vrot.lane.b32.xlu0 %v79, 127
    %v94 = vpop.permute.xlu0 %93
    %95 = vrot.lane.b32.xlu0 %v80, 127
    %v96 = vpop.permute.xlu0 %95
    %v97 = vsel %vm58, 0.0, %v94
    %v98 = vsel %vm58, 0.0, %v96
    %99 = vrot.lane.b32.xlu0 %v68, 1
    %v100 = vpop.permute.xlu0 %99
    %101 = vrot.lane.b32.xlu0 %v69, 1
    %v102 = vpop.permute.xlu0 %101
    %v103 = vsel %vm57, 0.0, %v100
    %v104 = vsel %vm57, 0.0, %v102
    %105 = vrot.lane.b32.xlu0 %v68, 127
    %v106 = vpop.permute.xlu0 %105
    %107 = vrot.lane.b32.xlu0 %v69, 127
    %v108 = vpop.permute.xlu0 %107
    %v109 = vsel %vm58, 0.0, %v106
    %v110 = vsel %vm58, 0.0, %v108
    %111 = vrot.lane.b32.xlu0 %v79, 1
    %v112 = vpop.permute.xlu0 %111
    %113 = vrot.lane.b32.xlu0 %v80, 1
    %v114 = vpop.permute.xlu0 %113
    %v115 = vsel %vm57, 0.0, %v112
    %v116 = vsel %vm57, 0.0, %v114
    %vm117 = vcmp.ge.f32.partialorder %v45, -1.9634954
    %vm118 = vcmp.ge.f32.partialorder %v46, -1.9634954
    %vm119 = vcmp.lt.f32.partialorder %v45, -1.1780972
    %vm120 = vcmp.lt.f32.partialorder %v46, -1.1780972
    %vm121 = vmand %vm117, %vm119
    %vm122 = vmand %vm118, %vm120
    %vm123 = vcmp.ge.f32.partialorder %v45, 1.1780972
    %vm124 = vcmp.ge.f32.partialorder %v46, 1.1780972
    %vm125 = vcmp.lt.f32.partialorder %v45, 1.9634954
    %vm126 = vcmp.lt.f32.partialorder %v46, 1.9634954
    %vm127 = vmand %vm123, %vm125
    %vm128 = vmand %vm124, %vm126
    %vm129 = vmor %vm121, %vm127
    %vm130 = vmor %vm122, %vm128
    %vm131 = vcmp.ge.f32.partialorder %v45, -1.1780972
    %vm132 = vcmp.ge.f32.partialorder %v46, -1.1780972
    %vm133 = vcmp.lt.f32.partialorder %v45, -0.3926991
    %vm134 = vcmp.lt.f32.partialorder %v46, -0.3926991
    %vm135 = vmand %vm131, %vm133
    %vm136 = vmand %vm132, %vm134
    %vm137 = vcmp.ge.f32.partialorder %v45, -0.3926991
    %vm138 = vcmp.ge.f32.partialorder %v46, -0.3926991
    %vm139 = vcmp.lt.f32.partialorder %v45, 0.3926991
    %vm140 = vcmp.lt.f32.partialorder %v46, 0.3926991
    %vm141 = vmand %vm137, %vm139
    %vm142 = vmand %vm138, %vm140
    %vm143 = vcmp.ge.f32.partialorder %v45, 0.3926991
    %vm144 = vcmp.ge.f32.partialorder %v46, 0.3926991
    %vm145 = vcmp.lt.f32.partialorder %v45, 1.1780972
    %vm146 = vcmp.lt.f32.partialorder %v46, 1.1780972
    %vm147 = vmand %vm143, %vm145
    %vm148 = vmand %vm144, %vm146
    %vm149 = vcmp.lt.f32.partialorder %v43, %v79
    %vm150 = vcmp.lt.f32.partialorder %v44, %v80
    %vm151 = vcmp.lt.f32.partialorder %v43, %v68
    %vm152 = vcmp.lt.f32.partialorder %v44, %v69
    %vm153 = vmor %vm149, %vm151
    %vm154 = vmor %vm150, %vm152
    %vm155 = vmand %vm129, %vm153
    %vm156 = vmand %vm130, %vm154
    %vm157 = vcmp.lt.f32.partialorder %v43, %v97
    %vm158 = vcmp.lt.f32.partialorder %v44, %v98
    %vm159 = vcmp.lt.f32.partialorder %v43, %v103
    %vm160 = vcmp.lt.f32.partialorder %v44, %v104
    %vm161 = vmor %vm157, %vm159
    %vm162 = vmor %vm158, %vm160
    %vm163 = vmand %vm135, %vm161
    %vm164 = vmand %vm136, %vm162
    %vm165 = vmor %vm155, %vm163
    %vm166 = vmor %vm156, %vm164
    %vm167 = vcmp.lt.f32.partialorder %v43, %v85
    %vm168 = vcmp.lt.f32.partialorder %v44, %v86
    %vm169 = vcmp.lt.f32.partialorder %v43, %v91
    %vm170 = vcmp.lt.f32.partialorder %v44, %v92
    %vm171 = vmor %vm167, %vm169
    %vm172 = vmor %vm168, %vm170
    %vm173 = vmand %vm141, %vm171
    %vm174 = vmand %vm142, %vm172
    %vm175 = vmor %vm165, %vm173
    %vm176 = vmor %vm166, %vm174
    %vm177 = vcmp.lt.f32.partialorder %v43, %v109
    %vm178 = vcmp.lt.f32.partialorder %v44, %v110
    %vm179 = vcmp.lt.f32.partialorder %v43, %v115
    %vm180 = vcmp.lt.f32.partialorder %v44, %v116
    %vm181 = vmor %vm177, %vm179
    %vm182 = vmor %vm178, %vm180
    %vm183 = vmand %vm147, %vm181
    %vm184 = vmand %vm148, %vm182
    %vm185 = vmor %vm175, %vm183
    %vm186 = vmor %vm176, %vm184
    %v187 = vsel %vm185, 0.0, %v43
    %v188 = vsel %vm186, 0.0, %v44
    %189 = vst [vmem:[#allocation7] sm:$0xff] %v187
    %190 = vst [vmem:[#allocation7 + $0x8] sm:$0xff] %v188
    // Predicated region
    $region22: #{tpu_custom_call.1} parent=1 // pred_check
      _
    $region23: #{tpu_custom_call.1} parent=1 // pred_check_branch
      %192 = sbr.rel (0) target = $region25
    $region24: #{tpu_custom_call.1} parent=1 // pred_region
      %s194 = ssub.s32 256, 256
      %195 = vsyncadd [#allocation4], %s194
      %s196 = sshll.u32 [#allocation7], 4
      %s197 = int_to_ptr.vmem [resolvable:$true] %s196
      %202 = dma.vmem_to_hbm [thread:$0]  %s197, 256, %s3, [#allocation4], 128, 128, 8
    $region25: #{tpu_custom_call.1} parent=1 // pred_fallthru
      _
    // Predicated region
    $region26: #{tpu_custom_call.1} parent=1 // pred_check
      _
    $region27: #{tpu_custom_call.1} parent=1 // pred_check_branch
      %204 = sbr.rel (0) target = $region29
    $region28: #{tpu_custom_call.1} parent=1 // pred_region
      %205 = dma.done [#allocation4], 256
    $region29: #{tpu_custom_call.1} parent=1 // pred_fallthru
      _
    %206 = vsyncpa [#allocation3], 1
    %207 = vsyncpa [#allocation6], 1
    %208 = vsyncpa [#allocation4], 1

</llo_original>
